<compile_context>
chip_gen: v7x
topology: tpu7x:2x2x1
jax: 0.10.0
libtpu: 0.0.40
codegen_flags: <defaults>
</compile_context>

<pallas_src>
import functools

import jax
import jax.numpy as jnp
from jax.experimental import pallas as pl
from jax.experimental.pallas import tpu as pltpu

_MIB = 1024 * 1024


def _round_up(v, m):
    return -(-v // m) * m


def _padded_tile_bytes(shape, dtype):
    """VMEM footprint of a tile: last dim -> 128 lanes, 2nd-last -> sublane quantum."""
    itemsize = jnp.dtype(dtype).itemsize
    sub = max(8, 32 // itemsize)            # 8 for f32, 16 for bf16, 32 for int8/fp8
    dims = list(shape)
    dims[-1] = _round_up(dims[-1], 128)
    if len(dims) >= 2:
        dims[-2] = _round_up(dims[-2], sub)
    n_elems = 1
    for d in dims:
        n_elems *= d
    return n_elems * itemsize


def _footprint_bytes(bn, bb, g, Fin, Fout, x_dtype, w_dtype, o_dtype):
    """Padded VMEM bytes for one grid step (double-buffered operands + f32 result)."""
    return (2 * _padded_tile_bytes((bn, bb, Fin), x_dtype)
            + 2 * _padded_tile_bytes((bn, Fin, Fout), w_dtype)
            + 2 * _padded_tile_bytes((bn, 1, Fout), w_dtype)
            + 2 * _padded_tile_bytes((max(1, bn // g), bb, g * Fout), o_dtype)
            + _padded_tile_bytes((bn, bb, Fout), jnp.float32))


def _vmem_config():
    """Per-generation VMEM budget/limit and whether to split the n axis for 2 TCs."""
    cap = 64 * _MIB                         # conservative default = v7x per-core VMEM
    cores = None
    try:
        info = pltpu.get_tpu_info()
        v = getattr(info, "vmem_capacity_bytes", None)
        if v:
            cap = int(v)
        for name in ("num_cores", "core_count", "num_tensorcores"):
            c = getattr(info, name, None)
            if isinstance(c, int) and c > 0:
                cores = c
                break
    except Exception:
        pass
    if cores is None:
        # 64 MiB per-core VMEM is the 2-TensorCore generation (v7x);
        # v5e / v6e have 128 MiB and a single TensorCore.
        cores = 2 if cap <= 64 * _MIB else 1
    limit = max(32 * _MIB, min(int(cap * 0.8), cap - 16 * _MIB))
    budget = min(int(cap * 0.62), limit - 8 * _MIB)
    return budget, limit, cores > 1


def _choose_blocks(n, B, Fin, Fout, g, x_dtype, w_dtype, o_dtype, budget, prefer_split):
    """Pick (block_n, block_b) = largest tiles (fewest grid steps) that fit the budget."""
    sub_x = max(8, 32 // jnp.dtype(x_dtype).itemsize)

    def fits(bn, bb):
        return _footprint_bytes(bn, bb, g, Fin, Fout, x_dtype, w_dtype, o_dtype) <= budget

    bb_cands = [B]
    t = 1024
    while t >= sub_x:
        if t < B:
            bb_cands.append(t)
        t //= 2

    n_units = max(1, n // g)                # block_n is chosen in units of g
    best = None                             # (key, bn, bb); key = (grid_steps, -bb)
    for cand_bb in bb_cands:
        if not fits(g, cand_bb):
            continue
        lo, hi = 1, n_units
        while lo < hi:                      # largest multiple of g that fits
            mid = (lo + hi + 1) // 2
            if fits(g * mid, cand_bb):
                lo = mid
            else:
                hi = mid - 1
        cand_bn = g * lo
        steps = (-(-n // cand_bn)) * (-(-B // cand_bb))
        key = (steps, -cand_bb)
        if best is None or key < best[0]:
            best = (key, cand_bn, cand_bb)

    if best is None:
        bn, bb = g, min(B, sub_x)           # last-resort tiny tile
    else:
        bn, bb = best[1], best[2]
    bn = min(bn, n)

    if prefer_split and (-(-n // bn)) == 1 and n_units >= 2:
        # >= 2 grid steps along the "parallel" n axis so both v7x TCs get work.
        bn = g * ((n_units + 1) // 2)
    return bn, bb


def _nlinear_kernel(x_ref, w_ref, b_ref, o_ref, *, groups, f_out):
    # x_ref: (bn, bb, Fin)  w_ref: (bn, Fin, Fout)  b_ref: (bn, 1, Fout)
    # o_ref: (bn//groups, bb, groups*Fout)
    y = jnp.einsum("nbk,nkf->nbf", x_ref[...], w_ref[...],
                   preferred_element_type=jnp.float32)
    y = y + b_ref[...].astype(jnp.float32)          # (bn,1,Fout) broadcasts over bb
    if groups == 1:
        o_ref[...] = y.astype(o_ref.dtype)
    else:
        bn, bb = y.shape[0], y.shape[1]
        yg = y.reshape(bn // groups, groups, bb, f_out)   # split of outer dim: free
        # Pack `groups` linears along the lane axis -> dense 128-lane stores.
        o_ref[...] = jnp.concatenate(
            [yg[:, j] for j in range(groups)], axis=-1).astype(o_ref.dtype)


def nlinear_forward(x, weight, bias):
    """x: (B, n, Fin), weight: (n, Fin, Fout), bias: (n, Fout) -> (B, n, Fout)."""
    B, n, Fin = x.shape
    n_w, Fin_w, Fout = weight.shape
    assert n == n_w and Fin == Fin_w
    assert bias.shape == (n, Fout)

    budget, vmem_limit, prefer_split = _vmem_config()

    # Lane-dense output packing factor.
    g = 1
    if Fout < 128 and 128 % Fout == 0 and n % (128 // Fout) == 0:
        g = 128 // Fout

    bn, bb = _choose_blocks(n, B, Fin, Fout, g, x.dtype, weight.dtype, x.dtype,
                            budget, prefer_split)

    x_t = jnp.transpose(x, (1, 0, 2))               # (n, B, Fin) batch-leading
    bias3 = bias.reshape(n, 1, Fout)                # broadcasts over B in-kernel

    grid = (pl.cdiv(n, bn), pl.cdiv(B, bb))
    itemsize = jnp.dtype(x.dtype).itemsize
    cost = pl.CostEstimate(
        flops=2 * B * n * Fin * Fout,
        transcendentals=0,
        bytes_accessed=(x.size * itemsize
                        + weight.size * jnp.dtype(weight.dtype).itemsize
                        + bias.size * jnp.dtype(bias.dtype).itemsize
                        + B * n * Fout * itemsize),
    )

    out_packed = pl.pallas_call(
        functools.partial(_nlinear_kernel, groups=g, f_out=Fout),
        out_shape=jax.ShapeDtypeStruct((n // g, B, g * Fout), x.dtype),
        grid_spec=pltpu.PrefetchScalarGridSpec(
            num_scalar_prefetch=0,
            grid=grid,
            in_specs=[
                pl.BlockSpec((bn, bb, Fin), lambda i, b: (i, b, 0)),
                pl.BlockSpec((bn, Fin, Fout), lambda i, b: (i, 0, 0)),   # b-invariant:
                pl.BlockSpec((bn, 1, Fout), lambda i, b: (i, 0, 0)),     # stays resident
            ],
            out_specs=pl.BlockSpec((bn // g, bb, g * Fout), lambda i, b: (i, b, 0)),
        ),
        compiler_params=pltpu.CompilerParams(
            dimension_semantics=("parallel", "arbitrary"),
            vmem_limit_bytes=vmem_limit,
        ),
        cost_estimate=cost,
    )(x_t, weight, bias3)

    # Unpack (n//g, B, g*Fout) -> (B, n, Fout).
    out = out_packed.reshape(n // g, B, g, Fout).transpose(1, 0, 2, 3)
    return out.reshape(B, n, Fout)


def init_params(key, n, in_features, out_features, dtype=jnp.float32):
    # Matches _NLinear.reset_parameters: uniform(-in^-0.5, in^-0.5).
    bound = in_features ** (-0.5)
    kw, kb = jax.random.split(key)
    weight = jax.random.uniform(
        kw, (n, in_features, out_features), dtype, minval=-bound, maxval=bound)
    bias = jax.random.uniform(
        kb, (n, out_features), dtype, minval=-bound, maxval=bound)
    return weight, bias


if __name__ == "__main__":
    B, n, Fin, Fout = 2, 4, 16, 32

    key = jax.random.PRNGKey(0)
    kx, kp = jax.random.split(key)
    x = jax.random.normal(kx, (B, n, Fin), jnp.float32)
    weight, bias = init_params(kp, n, Fin, Fout)

    out = jax.block_until_ready(nlinear_forward(x, weight, bias))

    # Pure-JAX reference of the PyTorch forward.
    ref = jnp.squeeze(x[..., None, :] @ weight, axis=-2) + bias
    assert out.shape == (B, n, Fout)
    assert jnp.allclose(out, ref, atol=1e-5, rtol=1e-5)

    print("KERNEL_OK")
</pallas_src>

<mosaic_0001>
module attributes {stable_mosaic.version = 11 : i64} {
  func.func @_nlinear_kernel(%arg0: i32, %arg1: i32, %arg2: memref<4x2x16xf32, #tpu.memory_space<vmem>>, %arg3: memref<4x16x32xf32, #tpu.memory_space<vmem>>, %arg4: memref<4x1x32xf32, #tpu.memory_space<vmem>>, %arg5: memref<1x2x128xf32, #tpu.memory_space<vmem>>) attributes {dimension_semantics = [#tpu.dimension_semantics<parallel>, #tpu.dimension_semantics<arbitrary>], iteration_bounds = array<i64: 1, 1>, scalar_prefetch = 0 : i64, scratch_operands = 0 : i64, tpu.core_type = #tpu.core_type<tc>, window_params = [{transform_indices = @transform_0, window_bounds = array<i64: 4, 2, 16>}, {transform_indices = @transform_1, window_bounds = array<i64: 4, 16, 32>}, {transform_indices = @transform_2, window_bounds = array<i64: 4, 1, 32>}, {transform_indices = @transform_3, window_bounds = array<i64: 1, 2, 128>}]} {
    %c0 = arith.constant 0 : index
    %c0_0 = arith.constant 0 : index
    %c0_1 = arith.constant 0 : index
    %0 = vector.load %arg2[%c0, %c0_0, %c0_1] : memref<4x2x16xf32, #tpu.memory_space<vmem>>, vector<4x2x16xf32>
    %c0_2 = arith.constant 0 : index
    %c0_3 = arith.constant 0 : index
    %c0_4 = arith.constant 0 : index
    %1 = vector.load %arg3[%c0_2, %c0_3, %c0_4] : memref<4x16x32xf32, #tpu.memory_space<vmem>>, vector<4x16x32xf32>
    "tpu.trace_start"() <{level = 10 : i32, message = "nbk,nkf->nbf"}> : () -> ()
    %cst = arith.constant dense<0.000000e+00> : vector<4x2x32xf32>
    %2 = tpu.matmul %0, %1, %cst {dimension_numbers = #tpu.dot_dimension_numbers<[2], [1], [1], [2], [0, 0, 0, 1, 1, 2], [0], [0]>} : vector<4x2x16xf32>, vector<4x16x32xf32>, vector<4x2x32xf32> -> vector<4x2x32xf32>
    "tpu.trace_stop"() : () -> ()
    %c0_5 = arith.constant 0 : index
    %c0_6 = arith.constant 0 : index
    %c0_7 = arith.constant 0 : index
    %3 = vector.load %arg4[%c0_5, %c0_6, %c0_7] : memref<4x1x32xf32, #tpu.memory_space<vmem>>, vector<4x1x32xf32>
    %4 = vector.broadcast %3 : vector<4x1x32xf32> to vector<4x2x32xf32>
    %5 = arith.addf %2, %4 : vector<4x2x32xf32>
    %6 = vector.shape_cast %5 : vector<4x2x32xf32> to vector<1x4x2x32xf32>
    %7 = vector.extract_strided_slice %6 {offsets = [0, 0, 0, 0], sizes = [1, 1, 2, 32], strides = [1, 1, 1, 1]} : vector<1x4x2x32xf32> to vector<1x1x2x32xf32>
    %8 = vector.shape_cast %7 : vector<1x1x2x32xf32> to vector<1x2x32xf32>
    %9 = vector.extract_strided_slice %6 {offsets = [0, 1, 0, 0], sizes = [1, 1, 2, 32], strides = [1, 1, 1, 1]} : vector<1x4x2x32xf32> to vector<1x1x2x32xf32>
    %10 = vector.shape_cast %9 : vector<1x1x2x32xf32> to vector<1x2x32xf32>
    %11 = vector.extract_strided_slice %6 {offsets = [0, 2, 0, 0], sizes = [1, 1, 2, 32], strides = [1, 1, 1, 1]} : vector<1x4x2x32xf32> to vector<1x1x2x32xf32>
    %12 = vector.shape_cast %11 : vector<1x1x2x32xf32> to vector<1x2x32xf32>
    %13 = vector.extract_strided_slice %6 {offsets = [0, 3, 0, 0], sizes = [1, 1, 2, 32], strides = [1, 1, 1, 1]} : vector<1x4x2x32xf32> to vector<1x1x2x32xf32>
    %14 = vector.shape_cast %13 : vector<1x1x2x32xf32> to vector<1x2x32xf32>
    %15 = tpu.concatenate %8, %10, %12, %14 in 2 : vector<1x2x32xf32>, vector<1x2x32xf32>, vector<1x2x32xf32>, vector<1x2x32xf32> -> vector<1x2x128xf32>
    %c0_8 = arith.constant 0 : index
    %c0_9 = arith.constant 0 : index
    %c0_10 = arith.constant 0 : index
    %16 = vector.load %arg5[%c0_8, %c0_9, %c0_10] : memref<1x2x128xf32, #tpu.memory_space<vmem>>, vector<1x2x128xf32>
    tpu.vector_store %arg5[%c0_8, %c0_9, %c0_10], %15 {strides = array<i32>} : memref<1x2x128xf32, #tpu.memory_space<vmem>>, vector<1x2x128xf32>,
    return
  }
  func.func @transform_0(%arg0: i32, %arg1: i32) -> (i32, i32, i32) {
    %c0_i32 = arith.constant 0 : i32
    %c0_i32_0 = arith.constant 0 : i32
    return %arg0, %arg1, %c0_i32 : i32, i32, i32
  }
  func.func @transform_1(%arg0: i32, %arg1: i32) -> (i32, i32, i32) {
    %c0_i32 = arith.constant 0 : i32
    %c0_i32_0 = arith.constant 0 : i32
    %c0_i32_1 = arith.constant 0 : i32
    return %arg0, %c0_i32, %c0_i32_0 : i32, i32, i32
  }
  func.func @transform_2(%arg0: i32, %arg1: i32) -> (i32, i32, i32) {
    %c0_i32 = arith.constant 0 : i32
    %c0_i32_0 = arith.constant 0 : i32
    %c0_i32_1 = arith.constant 0 : i32
    return %arg0, %c0_i32, %c0_i32_0 : i32, i32, i32
  }
  func.func @transform_3(%arg0: i32, %arg1: i32) -> (i32, i32, i32) {
    %c0_i32 = arith.constant 0 : i32
    %c0_i32_0 = arith.constant 0 : i32
    return %arg0, %arg1, %c0_i32 : i32, i32, i32
  }
}

</mosaic_0001>

<llo_original>
// kernel: tpu_custom_call.1
$region0: #{tpu_custom_call.1}
  #allocation0 [shape = 'u32[]', space=smem, size = 0x4, offset = 0x4, fixed_abs, tag = 'smem constant byte address 0x4 - core index']
  #allocation1 [shape = 'u32[144,128]{1,0:T(1,128)}', space=vmem, size = 0x12000, scoped, tag = 'internal scratch']
  %s0 = inlined_call_operand.hbm [shape: f32[4,2,16], index: 0, kind: input, shape index: {}]
  %s1 = inlined_call_operand.hbm [shape: f32[4,16,32], index: 1, kind: input, shape index: {}]
  %s2 = inlined_call_operand.vmem [shape: f32[4,1,32], index: 2, kind: input, shape index: {}]
  %s3 = inlined_call_operand.hbm [shape: f32[1,2,128], index: 3, kind: output, shape index: {}]
  %s4 = sld [smem:[#allocation0]]
  $region30: #{tpu_custom_call.1} parent=0
    _
  %s6 = ssub.s32 1, %s4
  %s7 = scalar_select 0, %s6, %s4
  $region1: #{tpu_custom_call.1} parent=0
    #allocation2 [shape = 'u8[4096]{0}', space=vmem, size = 0x1000, scoped, tag = 'input window, operand 0, single buffered']
    #allocation3 [shape = 's32[1]{0}', space=sflag, size = 0x4, scoped, tag = 'scoped memory for tpu_custom_call.1']
    #allocation4 [shape = 's32[1]{0}', space=sflag, size = 0x4, scoped, tag = 'scoped memory for tpu_custom_call.1']
    #allocation5 [shape = 'u8[32768]{0}', space=vmem, size = 0x8000, scoped, tag = 'input window, operand 1, single buffered']
    #allocation6 [shape = 's32[1]{0}', space=sflag, size = 0x4, scoped, tag = 'scoped memory for tpu_custom_call.1']
    #allocation7 [shape = 'u8[1024]{0}', space=vmem, size = 0x400, scoped, tag = 'output window, operand 0, single buffered']
    %8 = vsyncpa [#allocation3], 0
    %9 = vsyncpa [#allocation6], 0
    %10 = vsyncpa [#allocation4], 0
    // Predicated region
    $region2: #{tpu_custom_call.1} parent=1 // pred_check
      _
    $region3: #{tpu_custom_call.1} parent=1 // pred_check_branch
      %12 = sbr.rel (0) target = $region5
    $region4: #{tpu_custom_call.1} parent=1 // pred_region
      %s14 = ssub.s32 128, 128
      %15 = vsyncadd [#allocation3], %s14
      %s16 = sshll.u32 [#allocation2], 4
      %s17 = int_to_ptr.vmem [resolvable:$true] %s16
      %22 = dma.hbm_to_vmem [thread:$0]  %s0, 128, %s17, [#allocation3], 32, 32, 2
    $region5: #{tpu_custom_call.1} parent=1 // pred_fallthru
      _
    // Predicated region
    $region6: #{tpu_custom_call.1} parent=1 // pred_check
      _
    $region7: #{tpu_custom_call.1} parent=1 // pred_check_branch
      %24 = sbr.rel (0) target = $region9
    $region8: #{tpu_custom_call.1} parent=1 // pred_region
      %s26 = ssub.s32 1024, 1024
      %27 = vsyncadd [#allocation6], %s26
      %s28 = sshll.u32 [#allocation5], 4
      %s29 = int_to_ptr.vmem [resolvable:$true] %s28
      %34 = dma.hbm_to_vmem [thread:$0]  %s1, 1024, %s29, [#allocation6], 128, 128, 8
    $region9: #{tpu_custom_call.1} parent=1 // pred_fallthru
      _
    // Predicated region
    $region10: #{tpu_custom_call.1} parent=1 // pred_check
      _
    $region11: #{tpu_custom_call.1} parent=1 // pred_check_branch
      %36 = sbr.rel (0) target = $region13
    $region12: #{tpu_custom_call.1} parent=1 // pred_region
      _
    $region13: #{tpu_custom_call.1} parent=1 // pred_fallthru
      _
    // Predicated region
    $region14: #{tpu_custom_call.1} parent=1 // pred_check
      _
    $region15: #{tpu_custom_call.1} parent=1 // pred_check_branch
      %38 = sbr.rel (0) target = $region17
    $region16: #{tpu_custom_call.1} parent=1 // pred_region
      %39 = dma.done [#allocation3], 128
    $region17: #{tpu_custom_call.1} parent=1 // pred_fallthru
      _
    // Predicated region
    $region18: #{tpu_custom_call.1} parent=1 // pred_check
      _
    $region19: #{tpu_custom_call.1} parent=1 // pred_check_branch
      %41 = sbr.rel (0) target = $region21
    $region20: #{tpu_custom_call.1} parent=1 // pred_region
      %42 = dma.done [#allocation6], 1024
    $region21: #{tpu_custom_call.1} parent=1 // pred_fallthru
      _
    %v43 = vld [vmem:[#allocation2] sm:$0x3]
    %v44 = vld [vmem:[#allocation2 + $0x2] sm:$0x3]
    %v45 = vld [vmem:[#allocation2 + $0x4] sm:$0x3]
    %v46 = vld [vmem:[#allocation2 + $0x6] sm:$0x3]
    %v47 = vld [vmem:[#allocation5] sm:$0xff]
    %v48 = vld [vmem:[#allocation5 + $0x8] sm:$0xff]
    %v49 = vld [vmem:[#allocation5 + $0x10] sm:$0xff]
    %v50 = vld [vmem:[#allocation5 + $0x18] sm:$0xff]
    %v51 = vld [vmem:[#allocation5 + $0x20] sm:$0xff]
    %v52 = vld [vmem:[#allocation5 + $0x28] sm:$0xff]
    %v53 = vld [vmem:[#allocation5 + $0x30] sm:$0xff]
    %v54 = vld [vmem:[#allocation5 + $0x38] sm:$0xff]
    %v55 = vld [vmem:[%s2] sm:$0x1]
    %v56 = vld [vmem:[%s2 + $0x1] sm:$0x1]
    %v57 = vld [vmem:[%s2 + $0x2] sm:$0x1]
    %v58 = vld [vmem:[%s2 + $0x3] sm:$0x1]
    %v63 = vlaneseq
    %v64 = vshrl.u32 %v63, 7
    %v65 = vsub.s32 0, %v64
    %v66 = vrot.slane %v55, %v65
    %v67 = vlaneseq
    %v68 = vshrl.u32 %v67, 7
    %v69 = vsub.s32 0, %v68
    %v70 = vrot.slane %v56, %v69
    %v71 = vlaneseq
    %v72 = vshrl.u32 %v71, 7
    %v73 = vsub.s32 0, %v72
    %v74 = vrot.slane %v57, %v73
    %v75 = vlaneseq
    %v76 = vshrl.u32 %v75, 7
    %v77 = vsub.s32 0, %v76
    %v78 = vrot.slane %v58, %v77
    %vm83 = vcmask 130048
    %v85 = vsel %vm83, %v43, 0
    %87 = vmatprep.subr.mxu0 0.0
    %88 = vmatpush1.msra.mxu0 %v47
    %89 = vmatprep.subr.mxu0 0.0
    %90 = vmatpush1.msra.mxu0 %v48
    %91 = vmatprep.subr.mxu0 0.0
    %92 = vmatpush1.msra.mxu0 0.0
    %93 = vmatprep.subr.mxu0 0.0
    %94 = vmatpush1.msra.mxu0 0.0
    %95 = vmatprep.subr.mxu0 0.0
    %96 = vmatpush1.msra.mxu0 0.0
    %97 = vmatprep.subr.mxu0 0.0
    %98 = vmatpush1.msra.mxu0 0.0
    %99 = vmatprep.subr.mxu0 0.0
    %100 = vmatpush1.msra.mxu0 0.0
    %101 = vmatprep.subr.mxu0 0.0
    %102 = vmatpush1.msra.mxu0 0.0
    %103 = vmatprep.subr.mxu0 0.0
    %104 = vmatpush1.msra.mxu0 0.0
    %105 = vmatprep.subr.mxu0 0.0
    %106 = vmatpush1.msra.mxu0 0.0
    %107 = vmatprep.subr.mxu0 0.0
    %108 = vmatpush1.msra.mxu0 0.0
    %109 = vmatprep.subr.mxu0 0.0
    %110 = vmatpush1.msra.mxu0 0.0
    %111 = vmatprep.subr.mxu0 0.0
    %112 = vmatpush1.msra.mxu0 0.0
    %113 = vmatprep.subr.mxu0 0.0
    %114 = vmatpush1.msra.mxu0 0.0
    %115 = vmatprep.subr.mxu0 0.0
    %116 = vmatpush1.msra.mxu0 0.0
    %117 = vmatprep.subr.mxu0 0.0
    %118 = vmatpush1.msra.mxu0 0.0
    %119 = vmatprep.subr.mxu0 0.0
    %120 = vmatpush1.msra.mxu0 0.0
    %121 = vmatprep.subr.mxu0 0.0
    %122 = vmatpush1.msra.mxu0 0.0
    %123 = vmatprep.subr.mxu0 0.0
    %124 = vmatpush1.msra.mxu0 0.0
    %125 = vmatprep.subr.mxu0 0.0
    %126 = vmatpush1.msra.mxu0 0.0
    %127 = vmatprep.subr.mxu0 0.0
    %128 = vmatpush1.msra.mxu0 0.0
    %129 = vmatprep.subr.mxu0 0.0
    %130 = vmatpush1.msra.mxu0 0.0
    %131 = vmatprep.subr.mxu0 0.0
    %132 = vmatpush1.msra.mxu0 0.0
    %133 = vmatprep.subr.mxu0 0.0
    %134 = vmatpush1.msra.mxu0 0.0
    %135 = vmatprep.subr.mxu0 0.0
    %136 = vmatpush1.msra.mxu0 0.0
    %137 = vmatprep.subr.mxu0 0.0
    %138 = vmatpush1.msra.mxu0 0.0
    %139 = vmatprep.subr.mxu0 0.0
    %140 = vmatpush1.msra.mxu0 0.0
    %141 = vmatprep.subr.mxu0 0.0
    %142 = vmatpush1.msra.mxu0 0.0
    %143 = vmatprep.subr.mxu0 0.0
    %144 = vmatpush1.msra.mxu0 0.0
    %145 = vmatprep.subr.mxu0 0.0
    %146 = vmatpush1.msra.mxu0 0.0
    %147 = vmatprep.subr.mxu0 0.0
    %148 = vmatpush1.msra.mxu0 0.0
    %149 = vmatprep.subr.mxu0 0.0
    %150 = vmatpush1.msra.mxu0 0.0
    %151 = vmatprep.mubr.f32.mxu0 0.0
    %152 = vmatmul.mubr.f32.gmra.mrb[0].mxu0 %v85
    %v153 = vpop.f32.mrb[0].mxu0
    %v154 = vadd.f32 %v66, %v153
    %v155 = vpop.f32.mrb[0].mxu0
    %156 = vdwg.mxu0
    %v158 = vsel %vm83, %v44, 0
    %160 = vmatprep.subr.mxu0 0.0
    %161 = vmatpush1.msra.mxu0 %v49
    %162 = vmatprep.subr.mxu0 0.0
    %163 = vmatpush1.msra.mxu0 %v50
    %164 = vmatprep.subr.mxu0 0.0
    %165 = vmatpush1.msra.mxu0 0.0
    %166 = vmatprep.subr.mxu0 0.0
    %167 = vmatpush1.msra.mxu0 0.0
    %168 = vmatprep.subr.mxu0 0.0
    %169 = vmatpush1.msra.mxu0 0.0
    %170 = vmatprep.subr.mxu0 0.0
    %171 = vmatpush1.msra.mxu0 0.0
    %172 = vmatprep.subr.mxu0 0.0
    %173 = vmatpush1.msra.mxu0 0.0
    %174 = vmatprep.subr.mxu0 0.0
    %175 = vmatpush1.msra.mxu0 0.0
    %176 = vmatprep.subr.mxu0 0.0
    %177 = vmatpush1.msra.mxu0 0.0
    %178 = vmatprep.subr.mxu0 0.0
    %179 = vmatpush1.msra.mxu0 0.0
    %180 = vmatprep.subr.mxu0 0.0
    %181 = vmatpush1.msra.mxu0 0.0
    %182 = vmatprep.subr.mxu0 0.0
    %183 = vmatpush1.msra.mxu0 0.0
    %184 = vmatprep.subr.mxu0 0.0
    %185 = vmatpush1.msra.mxu0 0.0
    %186 = vmatprep.subr.mxu0 0.0
    %187 = vmatpush1.msra.mxu0 0.0
    %188 = vmatprep.subr.mxu0 0.0
    %189 = vmatpush1.msra.mxu0 0.0
    %190 = vmatprep.subr.mxu0 0.0
    %191 = vmatpush1.msra.mxu0 0.0
    %192 = vmatprep.subr.mxu0 0.0
    %193 = vmatpush1.msra.mxu0 0.0
    %194 = vmatprep.subr.mxu0 0.0
    %195 = vmatpush1.msra.mxu0 0.0
    %196 = vmatprep.subr.mxu0 0.0
    %197 = vmatpush1.msra.mxu0 0.0
    %198 = vmatprep.subr.mxu0 0.0
    %199 = vmatpush1.msra.mxu0 0.0
    %200 = vmatprep.subr.mxu0 0.0
    %201 = vmatpush1.msra.mxu0 0.0
    %202 = vmatprep.subr.mxu0 0.0
    %203 = vmatpush1.msra.mxu0 0.0
    %204 = vmatprep.subr.mxu0 0.0
    %205 = vmatpush1.msra.mxu0 0.0
    %206 = vmatprep.subr.mxu0 0.0
    %207 = vmatpush1.msra.mxu0 0.0
    %208 = vmatprep.subr.mxu0 0.0
    %209 = vmatpush1.msra.mxu0 0.0
    %210 = vmatprep.subr.mxu0 0.0
    %211 = vmatpush1.msra.mxu0 0.0
    %212 = vmatprep.subr.mxu0 0.0
    %213 = vmatpush1.msra.mxu0 0.0
    %214 = vmatprep.subr.mxu0 0.0
    %215 = vmatpush1.msra.mxu0 0.0
    %216 = vmatprep.subr.mxu0 0.0
    %217 = vmatpush1.msra.mxu0 0.0
    %218 = vmatprep.subr.mxu0 0.0
    %219 = vmatpush1.msra.mxu0 0.0
    %220 = vmatprep.subr.mxu0 0.0
    %221 = vmatpush1.msra.mxu0 0.0
    %222 = vmatprep.subr.mxu0 0.0
    %223 = vmatpush1.msra.mxu0 0.0
    %224 = vmatprep.mubr.f32.mxu0 0.0
    %225 = vmatmul.mubr.f32.gmra.mrb[0].mxu0 %v158
    %v226 = vpop.f32.mrb[0].mxu0
    %v227 = vadd.f32 %v70, %v226
    %v228 = vpop.f32.mrb[0].mxu0
    %229 = vdwg.mxu0
    %v231 = vsel %vm83, %v45, 0
    %233 = vmatprep.subr.mxu0 0.0
    %234 = vmatpush1.msra.mxu0 %v51
    %235 = vmatprep.subr.mxu0 0.0
    %236 = vmatpush1.msra.mxu0 %v52
    %237 = vmatprep.subr.mxu0 0.0
    %238 = vmatpush1.msra.mxu0 0.0
    %239 = vmatprep.subr.mxu0 0.0
    %240 = vmatpush1.msra.mxu0 0.0
    %241 = vmatprep.subr.mxu0 0.0
    %242 = vmatpush1.msra.mxu0 0.0
    %243 = vmatprep.subr.mxu0 0.0
    %244 = vmatpush1.msra.mxu0 0.0
    %245 = vmatprep.subr.mxu0 0.0
    %246 = vmatpush1.msra.mxu0 0.0
    %247 = vmatprep.subr.mxu0 0.0
    %248 = vmatpush1.msra.mxu0 0.0
    %249 = vmatprep.subr.mxu0 0.0
    %250 = vmatpush1.msra.mxu0 0.0
    %251 = vmatprep.subr.mxu0 0.0
    %252 = vmatpush1.msra.mxu0 0.0
    %253 = vmatprep.subr.mxu0 0.0
    %254 = vmatpush1.msra.mxu0 0.0
    %255 = vmatprep.subr.mxu0 0.0
    %256 = vmatpush1.msra.mxu0 0.0
    %257 = vmatprep.subr.mxu0 0.0
    %258 = vmatpush1.msra.mxu0 0.0
    %259 = vmatprep.subr.mxu0 0.0
    %260 = vmatpush1.msra.mxu0 0.0
    %261 = vmatprep.subr.mxu0 0.0
    %262 = vmatpush1.msra.mxu0 0.0
    %263 = vmatprep.subr.mxu0 0.0
    %264 = vmatpush1.msra.mxu0 0.0
    %265 = vmatprep.subr.mxu0 0.0
    %266 = vmatpush1.msra.mxu0 0.0
    %267 = vmatprep.subr.mxu0 0.0
    %268 = vmatpush1.msra.mxu0 0.0
    %269 = vmatprep.subr.mxu0 0.0
    %270 = vmatpush1.msra.mxu0 0.0
    %271 = vmatprep.subr.mxu0 0.0
    %272 = vmatpush1.msra.mxu0 0.0
    %273 = vmatprep.subr.mxu0 0.0
    %274 = vmatpush1.msra.mxu0 0.0
    %275 = vmatprep.subr.mxu0 0.0
    %276 = vmatpush1.msra.mxu0 0.0
    %277 = vmatprep.subr.mxu0 0.0
    %278 = vmatpush1.msra.mxu0 0.0
    %279 = vmatprep.subr.mxu0 0.0
    %280 = vmatpush1.msra.mxu0 0.0
    %281 = vmatprep.subr.mxu0 0.0
    %282 = vmatpush1.msra.mxu0 0.0
    %283 = vmatprep.subr.mxu0 0.0
    %284 = vmatpush1.msra.mxu0 0.0
    %285 = vmatprep.subr.mxu0 0.0
    %286 = vmatpush1.msra.mxu0 0.0
    %287 = vmatprep.subr.mxu0 0.0
    %288 = vmatpush1.msra.mxu0 0.0
    %289 = vmatprep.subr.mxu0 0.0
    %290 = vmatpush1.msra.mxu0 0.0
    %291 = vmatprep.subr.mxu0 0.0
    %292 = vmatpush1.msra.mxu0 0.0
    %293 = vmatprep.subr.mxu0 0.0
    %294 = vmatpush1.msra.mxu0 0.0
    %295 = vmatprep.subr.mxu0 0.0
    %296 = vmatpush1.msra.mxu0 0.0
    %297 = vmatprep.mubr.f32.mxu0 0.0
    %298 = vmatmul.mubr.f32.gmra.mrb[0].mxu0 %v231
    %v299 = vpop.f32.mrb[0].mxu0
    %v300 = vadd.f32 %v74, %v299
    %v301 = vpop.f32.mrb[0].mxu0
    %302 = vdwg.mxu0
    %v304 = vsel %vm83, %v46, 0
    %306 = vmatprep.subr.mxu0 0.0
    %307 = vmatpush1.msra.mxu0 %v53
    %308 = vmatprep.subr.mxu0 0.0
    %309 = vmatpush1.msra.mxu0 %v54
    %310 = vmatprep.subr.mxu0 0.0
    %311 = vmatpush1.msra.mxu0 0.0
    %312 = vmatprep.subr.mxu0 0.0
    %313 = vmatpush1.msra.mxu0 0.0
    %314 = vmatprep.subr.mxu0 0.0
    %315 = vmatpush1.msra.mxu0 0.0
    %316 = vmatprep.subr.mxu0 0.0
    %317 = vmatpush1.msra.mxu0 0.0
    %318 = vmatprep.subr.mxu0 0.0
    %319 = vmatpush1.msra.mxu0 0.0
    %320 = vmatprep.subr.mxu0 0.0
    %321 = vmatpush1.msra.mxu0 0.0
    %322 = vmatprep.subr.mxu0 0.0
    %323 = vmatpush1.msra.mxu0 0.0
    %324 = vmatprep.subr.mxu0 0.0
    %325 = vmatpush1.msra.mxu0 0.0
    %326 = vmatprep.subr.mxu0 0.0
    %327 = vmatpush1.msra.mxu0 0.0
    %328 = vmatprep.subr.mxu0 0.0
    %329 = vmatpush1.msra.mxu0 0.0
    %330 = vmatprep.subr.mxu0 0.0
    %331 = vmatpush1.msra.mxu0 0.0
    %332 = vmatprep.subr.mxu0 0.0
    %333 = vmatpush1.msra.mxu0 0.0
    %334 = vmatprep.subr.mxu0 0.0
    %335 = vmatpush1.msra.mxu0 0.0
    %336 = vmatprep.subr.mxu0 0.0
    %337 = vmatpush1.msra.mxu0 0.0
    %338 = vmatprep.subr.mxu0 0.0
    %339 = vmatpush1.msra.mxu0 0.0
    %340 = vmatprep.subr.mxu0 0.0
    %341 = vmatpush1.msra.mxu0 0.0
    %342 = vmatprep.subr.mxu0 0.0
    %343 = vmatpush1.msra.mxu0 0.0
    %344 = vmatprep.subr.mxu0 0.0
    %345 = vmatpush1.msra.mxu0 0.0
    %346 = vmatprep.subr.mxu0 0.0
    %347 = vmatpush1.msra.mxu0 0.0
    %348 = vmatprep.subr.mxu0 0.0
    %349 = vmatpush1.msra.mxu0 0.0
    %350 = vmatprep.subr.mxu0 0.0
    %351 = vmatpush1.msra.mxu0 0.0
    %352 = vmatprep.subr.mxu0 0.0
    %353 = vmatpush1.msra.mxu0 0.0
    %354 = vmatprep.subr.mxu0 0.0
    %355 = vmatpush1.msra.mxu0 0.0
    %356 = vmatprep.subr.mxu0 0.0
    %357 = vmatpush1.msra.mxu0 0.0
    %358 = vmatprep.subr.mxu0 0.0
    %359 = vmatpush1.msra.mxu0 0.0
    %360 = vmatprep.subr.mxu0 0.0
    %361 = vmatpush1.msra.mxu0 0.0
    %362 = vmatprep.subr.mxu0 0.0
    %363 = vmatpush1.msra.mxu0 0.0
    %364 = vmatprep.subr.mxu0 0.0
    %365 = vmatpush1.msra.mxu0 0.0
    %366 = vmatprep.subr.mxu0 0.0
    %367 = vmatpush1.msra.mxu0 0.0
    %368 = vmatprep.subr.mxu0 0.0
    %369 = vmatpush1.msra.mxu0 0.0
    %370 = vmatprep.mubr.f32.mxu0 0.0
    %371 = vmatmul.mubr.f32.gmra.mrb[0].mxu0 %v304
    %v372 = vpop.f32.mrb[0].mxu0
    %v373 = vadd.f32 %v78, %v372
    %v374 = vpop.f32.mrb[0].mxu0
    %375 = vdwg.mxu0
    %377 = vrot.lane.b32.xlu0 %v227, 32
    %v378 = vpop.permute.xlu0 %377
    %381 = vrot.lane.b32.xlu0 %v300, 64
    %v382 = vpop.permute.xlu0 %381
    %385 = vrot.lane.b32.xlu0 %v373, 96
    %v386 = vpop.permute.xlu0 %385
    %vm388 = vcmask 261120
    %v389 = vsel %vm388, %v154, %v378
    %vm390 = vcmask 523264
    %v391 = vsel %vm390, %v389, %v382
    %vm392 = vcmask 785408
    %v393 = vsel %vm392, %v391, %v386
    %394 = vst [vmem:[#allocation7] sm:$0x3] %v393
    // Predicated region
    $region22: #{tpu_custom_call.1} parent=1 // pred_check
      _
    $region23: #{tpu_custom_call.1} parent=1 // pred_check_branch
      %396 = sbr.rel (0) target = $region25
    $region24: #{tpu_custom_call.1} parent=1 // pred_region
      %s398 = ssub.s32 32, 32
      %399 = vsyncadd [#allocation4], %s398
      %s401 = sshll.u32 [#allocation7], 4
      %s402 = int_to_ptr.vmem [resolvable:$true] %s401
      %404 = dma.vmem_to_hbm [thread:$0]  %s402, 32, %s3, [#allocation4]
    $region25: #{tpu_custom_call.1} parent=1 // pred_fallthru
      _
    // Predicated region
    $region26: #{tpu_custom_call.1} parent=1 // pred_check
      _
    $region27: #{tpu_custom_call.1} parent=1 // pred_check_branch
      %406 = sbr.rel (0) target = $region29
    $region28: #{tpu_custom_call.1} parent=1 // pred_region
      %407 = dma.done [#allocation4], 32
    $region29: #{tpu_custom_call.1} parent=1 // pred_fallthru
      _
    %408 = vsyncpa [#allocation3], 1
    %409 = vsyncpa [#allocation6], 1
    %410 = vsyncpa [#allocation4], 1

</llo_original>
